<compile_context>
chip_gen: v7x
topology: tpu7x:2x2x1
jax: 0.10.0
libtpu: 0.0.40
codegen_flags: <defaults>
</compile_context>

<pallas_src>
import math

import jax
import jax.numpy as jnp
from jax import lax
from jax.experimental import pallas as pl
from jax.experimental.pallas import tpu as pltpu


# ----------------------------- config ---------------------------------------
N_EMBD = 32
N_HEAD = 4
HEAD_DIM = N_EMBD // N_HEAD
BLOCK_SIZE = 16          # max sequence length (mask buffer size)
USE_DIAGONAL_MASK = True
DIAGONAL_SIZE = 3
BIAS = True
DROPOUT = 0.0            # eval mode -> dropout is identity
# TODO(synk): attn_dropout / resid_dropout are identity in eval mode and are
# not implemented in the kernel.


# ----------------------------- kernel ---------------------------------------
def _attn_kernel(x_ref, w_qkv_ref, w_proj_ref, b_ref, o_ref):
    """One grid step = one batch element: (T, C) in, (T, C) out."""
    C, H, hd = N_EMBD, N_HEAD, HEAD_DIM
    x = x_ref[...]                                    # (T, C) f32
    T = x.shape[0]
    b_all = b_ref[...]                                # (1, 4C) = [b_qkv | b_proj]
    scale = jnp.float32(1.0 / math.sqrt(hd))

    # Fused QKV projection: single lane-dense MXU push (T,C)@(C,3C).
    qkv = (jnp.dot(x, w_qkv_ref[...], preferred_element_type=jnp.float32)
           + b_all[:, :3 * C])                        # (T, 3C)

    # Mask generated in-kernel (no HBM bytes, no cross-batch leakage possible).
    row = lax.broadcasted_iota(jnp.int32, (T, T), 0)
    col = lax.broadcasted_iota(jnp.int32, (T, T), 1)
    if USE_DIAGONAL_MASK:
        allowed = (col <= row) & (col > row - DIAGONAL_SIZE)
    else:
        allowed = col <= row

    ys = []
    for h in range(H):                                # static, unrolled
        q = qkv[:, h * hd:(h + 1) * hd]               # (T, hd)
        k = qkv[:, C + h * hd:C + (h + 1) * hd]
        v = qkv[:, 2 * C + h * hd:2 * C + (h + 1) * hd]

        # Scores: q @ k^T (contract last dims; no transpose op).
        att = lax.dot_general(q, k, (((1,), (1,)), ((), ())),
                              preferred_element_type=jnp.float32) * scale
        att = jnp.where(allowed, att, -jnp.inf)       # masked_fill semantics

        # Numerically-stable softmax, exact division.
        m = jnp.max(att, axis=-1, keepdims=True)
        e = jnp.exp(att - m)
        p = e / jnp.sum(e, axis=-1, keepdims=True)

        ys.append(jnp.dot(p, v, preferred_element_type=jnp.float32))  # (T, hd)

    y = jnp.concatenate(ys, axis=1)                   # (T, C) head concat
    out = (jnp.dot(y, w_proj_ref[...], preferred_element_type=jnp.float32)
           + b_all[:, 3 * C:])
    o_ref[...] = out.astype(o_ref.dtype)              # one lane-dense store


# ----------------------------- wrapper ---------------------------------------
def masked_self_attention(x, w_qkv, b_qkv, w_proj, b_proj):
    """x: (B, T, C) f32. Weights pre-transposed to (in, out) layout."""
    B, T, C = x.shape

    # Pack the two bias rows into one (1, 4C) lane-dense operand.
    b_all = jnp.concatenate([b_qkv, b_proj], axis=1)

    grid_spec = pltpu.PrefetchScalarGridSpec(
        num_scalar_prefetch=0,
        grid=(B,),                                            # one step per batch element
        in_specs=[
            pl.BlockSpec((None, T, C), lambda b: (b, 0, 0)),  # x tile (batch squeezed)
            pl.BlockSpec((C, 3 * C), lambda b: (0, 0)),       # fused QKV weights (resident)
            pl.BlockSpec((C, C), lambda b: (0, 0)),           # output-proj weights (resident)
            pl.BlockSpec((1, 4 * C), lambda b: (0, 0)),       # packed biases (resident)
        ],
        out_specs=pl.BlockSpec((None, T, C), lambda b: (b, 0, 0)),
    )

    return pl.pallas_call(
        _attn_kernel,
        out_shape=jax.ShapeDtypeStruct((B, T, C), x.dtype),
        grid_spec=grid_spec,
        compiler_params=pltpu.CompilerParams(
            dimension_semantics=("parallel",)),               # megacore on v7x
    )(x, w_qkv, w_proj, b_all)


# -------------------------- mask construction --------------------------------
def build_bias_mask(block_size, use_diagonal_mask, diagonal_size):
    if use_diagonal_mask:
        base = jnp.eye(block_size, dtype=jnp.float32)
        bias = base
        for i in range(1, diagonal_size):
            bias = bias + jnp.roll(base, shift=-i, axis=1)
        bias = jnp.tril(bias)
        bias = (bias > 0).astype(jnp.float32)
    else:
        bias = jnp.tril(jnp.ones((block_size, block_size), dtype=jnp.float32))
    return bias                                            # (block, block)


# ----------------------------- reference -------------------------------------
def reference(x, w_qkv, b_qkv, w_proj, b_proj, mask):
    B, T, C = x.shape
    qkv = x @ w_qkv + b_qkv[0]
    q, k, v = jnp.split(qkv, 3, axis=-1)

    def to_heads(t):
        return t.reshape(B, T, N_HEAD, HEAD_DIM).transpose(0, 2, 1, 3)

    q, k, v = to_heads(q), to_heads(k), to_heads(v)
    att = jnp.einsum("bhtd,bhsd->bhts", q, k) / math.sqrt(HEAD_DIM)
    att = jnp.where(mask[None, None] == 0, -jnp.inf, att)
    att = jax.nn.softmax(att, axis=-1)
    y = jnp.einsum("bhts,bhsd->bhtd", att, v)
    y = y.transpose(0, 2, 1, 3).reshape(B, T, C)
    return y @ w_proj + b_proj[0]


# ------------------------------- main -----------------------------------------
if __name__ == "__main__":
    B, T, C = 2, 8, N_EMBD

    key = jax.random.PRNGKey(0)
    kx, k1, k2, k3, k4 = jax.random.split(key, 5)

    x = jax.random.normal(kx, (B, T, C), dtype=jnp.float32)

    # nn.Linear-style init (uniform +-1/sqrt(fan_in)), stored transposed.
    bound_attn = 1.0 / math.sqrt(C)
    w_qkv = jax.random.uniform(k1, (C, 3 * C), jnp.float32,
                               -bound_attn, bound_attn)
    b_qkv = (jax.random.uniform(k2, (1, 3 * C), jnp.float32,
                                -bound_attn, bound_attn)
             if BIAS else jnp.zeros((1, 3 * C), jnp.float32))
    bound_proj = 1.0 / math.sqrt(C)
    w_proj = jax.random.uniform(k3, (C, C), jnp.float32,
                                -bound_proj, bound_proj)
    b_proj = (jax.random.uniform(k4, (1, C), jnp.float32,
                                 -bound_proj, bound_proj)
              if BIAS else jnp.zeros((1, C), jnp.float32))

    out = masked_self_attention(x, w_qkv, b_qkv, w_proj, b_proj)
    out = jax.block_until_ready(out)

    full_mask = build_bias_mask(BLOCK_SIZE, USE_DIAGONAL_MASK, DIAGONAL_SIZE)
    mask = full_mask[:T, :T]
    ref = reference(x, w_qkv, b_qkv, w_proj, b_proj, mask)

    # Exact softmax division + f32 matmuls -> tight tolerance.
    assert jnp.allclose(out, ref, atol=1e-4, rtol=1e-4), "mismatch vs reference"

    print("KERNEL_OK")
</pallas_src>

<mosaic_0001>
module attributes {stable_mosaic.version = 11 : i64} {
  func.func @_attn_kernel(%arg0: i32, %arg1: memref<1x8x32xf32, #tpu.memory_space<vmem>>, %arg2: memref<32x96xf32, #tpu.memory_space<vmem>>, %arg3: memref<32x32xf32, #tpu.memory_space<vmem>>, %arg4: memref<1x128xf32, #tpu.memory_space<vmem>>, %arg5: memref<1x8x32xf32, #tpu.memory_space<vmem>>) attributes {dimension_semantics = [#tpu.dimension_semantics<parallel>], iteration_bounds = array<i64: 2>, scalar_prefetch = 0 : i64, scratch_operands = 0 : i64, tpu.core_type = #tpu.core_type<tc>, window_params = [{transform_indices = @transform_0, window_bounds = array<i64: 1, 8, 32>}, {pipeline_mode = #tpu.pipeline_mode<synchronous>, transform_indices = @transform_1, window_bounds = array<i64: 32, 96>}, {pipeline_mode = #tpu.pipeline_mode<synchronous>, transform_indices = @transform_2, window_bounds = array<i64: 32, 32>}, {pipeline_mode = #tpu.pipeline_mode<synchronous>, transform_indices = @transform_3, window_bounds = array<i64: 1, 128>}, {transform_indices = @transform_4, window_bounds = array<i64: 1, 8, 32>}]} {
    %c0 = arith.constant 0 : index
    %c0_0 = arith.constant 0 : index
    %c0_1 = arith.constant 0 : index
    %0 = vector.load %arg1[%c0, %c0_0, %c0_1] : memref<1x8x32xf32, #tpu.memory_space<vmem>>, vector<1x8x32xf32>
    %1 = vector.shape_cast %0 : vector<1x8x32xf32> to vector<8x32xf32>
    %c0_2 = arith.constant 0 : index
    %c0_3 = arith.constant 0 : index
    %2 = vector.load %arg4[%c0_2, %c0_3] : memref<1x128xf32, #tpu.memory_space<vmem>>, vector<1x128xf32>
    %c0_4 = arith.constant 0 : index
    %c0_5 = arith.constant 0 : index
    %3 = vector.load %arg2[%c0_4, %c0_5] : memref<32x96xf32, #tpu.memory_space<vmem>>, vector<32x96xf32>
    %cst = arith.constant dense<0.000000e+00> : vector<8x96xf32>
    %4 = tpu.matmul %1, %3, %cst {dimension_numbers = #tpu.dot_dimension_numbers<[1], [0], [0], [1], [0, 0, 1, 1], [], []>} : vector<8x32xf32>, vector<32x96xf32>, vector<8x96xf32> -> vector<8x96xf32>
    %5 = vector.extract_strided_slice %2 {offsets = [0, 0], sizes = [1, 96], strides = [1, 1]} : vector<1x128xf32> to vector<1x96xf32>
    %6 = vector.broadcast %5 : vector<1x96xf32> to vector<8x96xf32>
    %7 = arith.addf %4, %6 : vector<8x96xf32>
    %8 = tpu.iota {dimensions = array<i32: 0>} : vector<8x8xi32>
    %9 = tpu.iota {dimensions = array<i32: 1>} : vector<8x8xi32>
    %10 = arith.cmpi sle, %9, %8 : vector<8x8xi32>
    %c3_i32 = arith.constant 3 : i32
    %11 = vector.broadcast %c3_i32 : i32 to vector<8x8xi32>
    %12 = arith.subi %8, %11 : vector<8x8xi32>
    %13 = arith.cmpi sgt, %9, %12 : vector<8x8xi32>
    %14 = arith.andi %10, %13 : vector<8x8xi1>
    %15 = vector.extract_strided_slice %7 {offsets = [0, 0], sizes = [8, 8], strides = [1, 1]} : vector<8x96xf32> to vector<8x8xf32>
    %16 = vector.extract_strided_slice %7 {offsets = [0, 32], sizes = [8, 8], strides = [1, 1]} : vector<8x96xf32> to vector<8x8xf32>
    %17 = vector.extract_strided_slice %7 {offsets = [0, 64], sizes = [8, 8], strides = [1, 1]} : vector<8x96xf32> to vector<8x8xf32>
    %cst_6 = arith.constant dense<0.000000e+00> : vector<8x8xf32>
    %18 = tpu.matmul %15, %16, %cst_6 {dimension_numbers = #tpu.dot_dimension_numbers<[1], [1], [0], [0], [0, 0, 1, 0], [], []>} : vector<8x8xf32>, vector<8x8xf32>, vector<8x8xf32> -> vector<8x8xf32>
    %cst_7 = arith.constant 0.353553385 : f32
    %19 = vector.broadcast %cst_7 : f32 to vector<8x8xf32>
    %20 = arith.mulf %18, %19 : vector<8x8xf32>
    %cst_8 = arith.constant 0xFF800000 : f32
    %21 = vector.broadcast %cst_8 : f32 to vector<8x8xf32>
    %22 = arith.select %14, %20, %21 : vector<8x8xi1>, vector<8x8xf32>
    %cst_9 = arith.constant dense<0xFF800000> : vector<8xf32>
    %23 = vector.multi_reduction <maximumf>, %22, %cst_9 [1] : vector<8x8xf32> to vector<8xf32>
    %24 = vector.shape_cast %23 : vector<8xf32> to vector<8x1xf32>
    %25 = vector.broadcast %24 : vector<8x1xf32> to vector<8x8xf32>
    %26 = arith.subf %22, %25 : vector<8x8xf32>
    %27 = math.exp %26 : vector<8x8xf32>
    %cst_10 = arith.constant dense<0.000000e+00> : vector<8xf32>
    %28 = vector.multi_reduction <add>, %27, %cst_10 [1] : vector<8x8xf32> to vector<8xf32>
    %29 = vector.shape_cast %28 : vector<8xf32> to vector<8x1xf32>
    %30 = vector.broadcast %29 : vector<8x1xf32> to vector<8x8xf32>
    %31 = arith.divf %27, %30 : vector<8x8xf32>
    %cst_11 = arith.constant dense<0.000000e+00> : vector<8x8xf32>
    %32 = tpu.matmul %31, %17, %cst_11 {dimension_numbers = #tpu.dot_dimension_numbers<[1], [0], [0], [1], [0, 0, 1, 1], [], []>} : vector<8x8xf32>, vector<8x8xf32>, vector<8x8xf32> -> vector<8x8xf32>
    %33 = vector.extract_strided_slice %7 {offsets = [0, 8], sizes = [8, 8], strides = [1, 1]} : vector<8x96xf32> to vector<8x8xf32>
    %34 = vector.extract_strided_slice %7 {offsets = [0, 40], sizes = [8, 8], strides = [1, 1]} : vector<8x96xf32> to vector<8x8xf32>
    %35 = vector.extract_strided_slice %7 {offsets = [0, 72], sizes = [8, 8], strides = [1, 1]} : vector<8x96xf32> to vector<8x8xf32>
    %cst_12 = arith.constant dense<0.000000e+00> : vector<8x8xf32>
    %36 = tpu.matmul %33, %34, %cst_12 {dimension_numbers = #tpu.dot_dimension_numbers<[1], [1], [0], [0], [0, 0, 1, 0], [], []>} : vector<8x8xf32>, vector<8x8xf32>, vector<8x8xf32> -> vector<8x8xf32>
    %cst_13 = arith.constant 0.353553385 : f32
    %37 = vector.broadcast %cst_13 : f32 to vector<8x8xf32>
    %38 = arith.mulf %36, %37 : vector<8x8xf32>
    %cst_14 = arith.constant 0xFF800000 : f32
    %39 = vector.broadcast %cst_14 : f32 to vector<8x8xf32>
    %40 = arith.select %14, %38, %39 : vector<8x8xi1>, vector<8x8xf32>
    %cst_15 = arith.constant dense<0xFF800000> : vector<8xf32>
    %41 = vector.multi_reduction <maximumf>, %40, %cst_15 [1] : vector<8x8xf32> to vector<8xf32>
    %42 = vector.shape_cast %41 : vector<8xf32> to vector<8x1xf32>
    %43 = vector.broadcast %42 : vector<8x1xf32> to vector<8x8xf32>
    %44 = arith.subf %40, %43 : vector<8x8xf32>
    %45 = math.exp %44 : vector<8x8xf32>
    %cst_16 = arith.constant dense<0.000000e+00> : vector<8xf32>
    %46 = vector.multi_reduction <add>, %45, %cst_16 [1] : vector<8x8xf32> to vector<8xf32>
    %47 = vector.shape_cast %46 : vector<8xf32> to vector<8x1xf32>
    %48 = vector.broadcast %47 : vector<8x1xf32> to vector<8x8xf32>
    %49 = arith.divf %45, %48 : vector<8x8xf32>
    %cst_17 = arith.constant dense<0.000000e+00> : vector<8x8xf32>
    %50 = tpu.matmul %49, %35, %cst_17 {dimension_numbers = #tpu.dot_dimension_numbers<[1], [0], [0], [1], [0, 0, 1, 1], [], []>} : vector<8x8xf32>, vector<8x8xf32>, vector<8x8xf32> -> vector<8x8xf32>
    %51 = vector.extract_strided_slice %7 {offsets = [0, 16], sizes = [8, 8], strides = [1, 1]} : vector<8x96xf32> to vector<8x8xf32>
    %52 = vector.extract_strided_slice %7 {offsets = [0, 48], sizes = [8, 8], strides = [1, 1]} : vector<8x96xf32> to vector<8x8xf32>
    %53 = vector.extract_strided_slice %7 {offsets = [0, 80], sizes = [8, 8], strides = [1, 1]} : vector<8x96xf32> to vector<8x8xf32>
    %cst_18 = arith.constant dense<0.000000e+00> : vector<8x8xf32>
    %54 = tpu.matmul %51, %52, %cst_18 {dimension_numbers = #tpu.dot_dimension_numbers<[1], [1], [0], [0], [0, 0, 1, 0], [], []>} : vector<8x8xf32>, vector<8x8xf32>, vector<8x8xf32> -> vector<8x8xf32>
    %cst_19 = arith.constant 0.353553385 : f32
    %55 = vector.broadcast %cst_19 : f32 to vector<8x8xf32>
    %56 = arith.mulf %54, %55 : vector<8x8xf32>
    %cst_20 = arith.constant 0xFF800000 : f32
    %57 = vector.broadcast %cst_20 : f32 to vector<8x8xf32>
    %58 = arith.select %14, %56, %57 : vector<8x8xi1>, vector<8x8xf32>
    %cst_21 = arith.constant dense<0xFF800000> : vector<8xf32>
    %59 = vector.multi_reduction <maximumf>, %58, %cst_21 [1] : vector<8x8xf32> to vector<8xf32>
    %60 = vector.shape_cast %59 : vector<8xf32> to vector<8x1xf32>
    %61 = vector.broadcast %60 : vector<8x1xf32> to vector<8x8xf32>
    %62 = arith.subf %58, %61 : vector<8x8xf32>
    %63 = math.exp %62 : vector<8x8xf32>
    %cst_22 = arith.constant dense<0.000000e+00> : vector<8xf32>
    %64 = vector.multi_reduction <add>, %63, %cst_22 [1] : vector<8x8xf32> to vector<8xf32>
    %65 = vector.shape_cast %64 : vector<8xf32> to vector<8x1xf32>
    %66 = vector.broadcast %65 : vector<8x1xf32> to vector<8x8xf32>
    %67 = arith.divf %63, %66 : vector<8x8xf32>
    %cst_23 = arith.constant dense<0.000000e+00> : vector<8x8xf32>
    %68 = tpu.matmul %67, %53, %cst_23 {dimension_numbers = #tpu.dot_dimension_numbers<[1], [0], [0], [1], [0, 0, 1, 1], [], []>} : vector<8x8xf32>, vector<8x8xf32>, vector<8x8xf32> -> vector<8x8xf32>
    %69 = vector.extract_strided_slice %7 {offsets = [0, 24], sizes = [8, 8], strides = [1, 1]} : vector<8x96xf32> to vector<8x8xf32>
    %70 = vector.extract_strided_slice %7 {offsets = [0, 56], sizes = [8, 8], strides = [1, 1]} : vector<8x96xf32> to vector<8x8xf32>
    %71 = vector.extract_strided_slice %7 {offsets = [0, 88], sizes = [8, 8], strides = [1, 1]} : vector<8x96xf32> to vector<8x8xf32>
    %cst_24 = arith.constant dense<0.000000e+00> : vector<8x8xf32>
    %72 = tpu.matmul %69, %70, %cst_24 {dimension_numbers = #tpu.dot_dimension_numbers<[1], [1], [0], [0], [0, 0, 1, 0], [], []>} : vector<8x8xf32>, vector<8x8xf32>, vector<8x8xf32> -> vector<8x8xf32>
    %cst_25 = arith.constant 0.353553385 : f32
    %73 = vector.broadcast %cst_25 : f32 to vector<8x8xf32>
    %74 = arith.mulf %72, %73 : vector<8x8xf32>
    %cst_26 = arith.constant 0xFF800000 : f32
    %75 = vector.broadcast %cst_26 : f32 to vector<8x8xf32>
    %76 = arith.select %14, %74, %75 : vector<8x8xi1>, vector<8x8xf32>
    %cst_27 = arith.constant dense<0xFF800000> : vector<8xf32>
    %77 = vector.multi_reduction <maximumf>, %76, %cst_27 [1] : vector<8x8xf32> to vector<8xf32>
    %78 = vector.shape_cast %77 : vector<8xf32> to vector<8x1xf32>
    %79 = vector.broadcast %78 : vector<8x1xf32> to vector<8x8xf32>
    %80 = arith.subf %76, %79 : vector<8x8xf32>
    %81 = math.exp %80 : vector<8x8xf32>
    %cst_28 = arith.constant dense<0.000000e+00> : vector<8xf32>
    %82 = vector.multi_reduction <add>, %81, %cst_28 [1] : vector<8x8xf32> to vector<8xf32>
    %83 = vector.shape_cast %82 : vector<8xf32> to vector<8x1xf32>
    %84 = vector.broadcast %83 : vector<8x1xf32> to vector<8x8xf32>
    %85 = arith.divf %81, %84 : vector<8x8xf32>
    %cst_29 = arith.constant dense<0.000000e+00> : vector<8x8xf32>
    %86 = tpu.matmul %85, %71, %cst_29 {dimension_numbers = #tpu.dot_dimension_numbers<[1], [0], [0], [1], [0, 0, 1, 1], [], []>} : vector<8x8xf32>, vector<8x8xf32>, vector<8x8xf32> -> vector<8x8xf32>
    %87 = tpu.concatenate %32, %50, %68, %86 in 1 : vector<8x8xf32>, vector<8x8xf32>, vector<8x8xf32>, vector<8x8xf32> -> vector<8x32xf32>
    %c0_30 = arith.constant 0 : index
    %c0_31 = arith.constant 0 : index
    %88 = vector.load %arg3[%c0_30, %c0_31] : memref<32x32xf32, #tpu.memory_space<vmem>>, vector<32x32xf32>
    %cst_32 = arith.constant dense<0.000000e+00> : vector<8x32xf32>
    %89 = tpu.matmul %87, %88, %cst_32 {dimension_numbers = #tpu.dot_dimension_numbers<[1], [0], [0], [1], [0, 0, 1, 1], [], []>} : vector<8x32xf32>, vector<32x32xf32>, vector<8x32xf32> -> vector<8x32xf32>
    %90 = vector.extract_strided_slice %2 {offsets = [0, 96], sizes = [1, 32], strides = [1, 1]} : vector<1x128xf32> to vector<1x32xf32>
    %91 = vector.broadcast %90 : vector<1x32xf32> to vector<8x32xf32>
    %92 = arith.addf %89, %91 : vector<8x32xf32>
    %c0_33 = arith.constant 0 : index
    %c0_34 = arith.constant 0 : index
    %c0_35 = arith.constant 0 : index
    %93 = vector.load %arg5[%c0_33, %c0_34, %c0_35] : memref<1x8x32xf32, #tpu.memory_space<vmem>>, vector<1x8x32xf32>
    %94 = vector.shape_cast %93 : vector<1x8x32xf32> to vector<8x32xf32>
    %95 = vector.shape_cast %92 : vector<8x32xf32> to vector<1x8x32xf32>
    tpu.vector_store %arg5[%c0_33, %c0_34, %c0_35], %95 {strides = array<i32>} : memref<1x8x32xf32, #tpu.memory_space<vmem>>, vector<1x8x32xf32>,
    return
  }
  func.func @transform_0(%arg0: i32) -> (i32, i32, i32) {
    %c0_i32 = arith.constant 0 : i32
    %c0_i32_0 = arith.constant 0 : i32
    %c0_i32_1 = arith.constant 0 : i32
    return %arg0, %c0_i32, %c0_i32_0 : i32, i32, i32
  }
  func.func @transform_1(%arg0: i32) -> (i32, i32) {
    %c0_i32 = arith.constant 0 : i32
    %c0_i32_0 = arith.constant 0 : i32
    %c0_i32_1 = arith.constant 0 : i32
    return %c0_i32, %c0_i32_0 : i32, i32
  }
  func.func @transform_2(%arg0: i32) -> (i32, i32) {
    %c0_i32 = arith.constant 0 : i32
    %c0_i32_0 = arith.constant 0 : i32
    %c0_i32_1 = arith.constant 0 : i32
    return %c0_i32, %c0_i32_0 : i32, i32
  }
  func.func @transform_3(%arg0: i32) -> (i32, i32) {
    %c0_i32 = arith.constant 0 : i32
    %c0_i32_0 = arith.constant 0 : i32
    %c0_i32_1 = arith.constant 0 : i32
    return %c0_i32, %c0_i32_0 : i32, i32
  }
  func.func @transform_4(%arg0: i32) -> (i32, i32, i32) {
    %c0_i32 = arith.constant 0 : i32
    %c0_i32_0 = arith.constant 0 : i32
    %c0_i32_1 = arith.constant 0 : i32
    return %arg0, %c0_i32, %c0_i32_0 : i32, i32, i32
  }
}

</mosaic_0001>

<llo_original>
// kernel: tpu_custom_call.1
$region0: #{tpu_custom_call.1}
  #allocation0 [shape = 'u32[]', space=smem, size = 0x4, offset = 0x4, fixed_abs, tag = 'smem constant byte address 0x4 - core index']
  #allocation1 [shape = 'u32[144,128]{1,0:T(1,128)}', space=vmem, size = 0x12000, scoped, tag = 'internal scratch']
  %s0 = inlined_call_operand.hbm [shape: f32[2,8,32], index: 0, kind: input, shape index: {}]
  %s1 = inlined_call_operand.hbm [shape: f32[32,96], index: 1, kind: input, shape index: {}]
  %s2 = inlined_call_operand.hbm [shape: f32[32,32], index: 2, kind: input, shape index: {}]
  %s3 = inlined_call_operand.vmem [shape: f32[1,128], index: 3, kind: input, shape index: {}]
  %s4 = inlined_call_operand.hbm [shape: f32[2,8,32], index: 4, kind: output, shape index: {}]
  %s5 = sld [smem:[#allocation0]]
  $region61: #{tpu_custom_call.1} parent=0
    _
  %s7 = ssub.s32 1, %s5
  %s8 = scalar_select 0, %s7, %s5
  $region1: #{tpu_custom_call.1} parent=0
    #allocation2 [shape = 'u8[8192]{0}', space=vmem, size = 0x2000, scoped, tag = 'input window, operand 0']
    #allocation3 [shape = 's32[2]{0}', space=sflag, size = 0x8, scoped, tag = 'scoped memory for tpu_custom_call.1']
    #allocation4 [shape = 's32[2]{0}', space=sflag, size = 0x8, scoped, tag = 'scoped memory for tpu_custom_call.1']
    #allocation5 [shape = 'u8[16384]{0}', space=vmem, size = 0x4000, scoped, tag = 'input window, operand 1, single buffered']
    #allocation6 [shape = 's32[1]{0}', space=sflag, size = 0x4, scoped, tag = 'scoped memory for tpu_custom_call.1']
    #allocation7 [shape = 'u8[16384]{0}', space=vmem, size = 0x4000, scoped, tag = 'input window, operand 2, single buffered']
    #allocation8 [shape = 'u8[8192]{0}', space=vmem, size = 0x2000, scoped, tag = 'output window, operand 0']
    %9 = vsyncpa [#allocation3], 0
    %s10 = scalar_lea.sflag [#allocation3], 1
    %11 = vsyncpa %s10, 0
    %12 = vsyncpa [#allocation6], 0
    %13 = vsyncpa [#allocation4], 0
    %s14 = scalar_lea.sflag [#allocation4], 1
    %15 = vsyncpa %s14, 0
    loop: start=0, step=1, limit=4
    $region2: #{tpu_custom_call.1} parent=1 // loop_pre_header
      _
    $region3: #{tpu_custom_call.1} parent=1 // loop_header
      %s17 = sphi 0, %s21
      %p18 = scmp.ge.s32.totalorder %s17, 4
      %s27 = sphi 0, %s29
      %s30 = sphi 0, %s27
      %s31 = sphi 0, %s30
      %s47 = sphi 0, %s31
      %s51 = sphi 0, %s51
      %s53 = sphi 0, %s51
      %s54 = sphi 0, %s53
      %s68 = sphi 0, %s54
      %s72 = sphi 0, %s72
      %s74 = sphi 0, %s72
      %s75 = sphi 0, %s74
      %s89 = sphi 0, %s75
      %s93 = sphi 0, %s93
      %s95 = sphi 0, %s93
      %s96 = sphi 0, %s95
      %s110 = sphi 0, %s96
      %s116 = sphi 0, %s118
      %s119 = sphi 0, %s116
      %s120 = sphi 0, %s119
      %s136 = sphi 0, %s120
    $region4: #{tpu_custom_call.1} parent=1 // loop_header_branch
      %20 = sbr.rel (%p18) target = $region8
    $region5: #{tpu_custom_call.1} parent=1 // loop_body
      %s22 = ssub.s32 %s17, 1
      %s23 = ssub.s32 %s17, 2
      %s24 = sadd.s32 %s17, 1
      %s25 = ssub.s32 %s17, %s24
      %p26 = scmp.eq.s32.totalorder %s25, 0
      %s28 = sadd.s32 %s27, 1
      %s29 = scalar_select %p26, %s27, %s28
      %p32 = pneg %p26
      %p33 = scmp.eq.s32.totalorder %s17, 1
      %p34 = por %p32, %p33
      %p35 = scmp.ne.s32.totalorder %s27, %s30
      %p36 = scmp.eq.s32.totalorder %s17, 0
      %p37 = por %p35, %p36
      %p38 = scmp.ne.s32.totalorder %s27, %s30
      %p39 = scmp.eq.s32.totalorder %s22, 1
      %p40 = por %p38, %p39
      %p41 = scmp.ne.s32.totalorder %s30, %s31
      %p42 = scmp.eq.s32.totalorder %s22, 0
      %p43 = por %p41, %p42
      %p44 = scmp.ne.s32.totalorder %s30, %s31
      %p45 = scmp.eq.s32.totalorder %s23, 1
      %p46 = por %p44, %p45
      %p48 = scmp.ne.s32.totalorder %s31, %s47
      %p49 = scmp.eq.s32.totalorder %s23, 0
      %p50 = por %p48, %p49
      %s52 = sadd.s32 %s51, 1
      %p55 = scmp.eq.s32.totalorder %s17, 1
      %p56 = scmp.ne.s32.totalorder %s51, %s53
      %p57 = scmp.eq.s32.totalorder %s17, 0
      %p58 = por %p56, %p57
      %p59 = scmp.ne.s32.totalorder %s51, %s53
      %p60 = scmp.eq.s32.totalorder %s22, 1
      %p61 = por %p59, %p60
      %p62 = scmp.ne.s32.totalorder %s53, %s54
      %p63 = scmp.eq.s32.totalorder %s22, 0
      %p64 = por %p62, %p63
      %p65 = scmp.ne.s32.totalorder %s53, %s54
      %p66 = scmp.eq.s32.totalorder %s23, 1
      %p67 = por %p65, %p66
      %p69 = scmp.ne.s32.totalorder %s54, %s68
      %p70 = scmp.eq.s32.totalorder %s23, 0
      %p71 = por %p69, %p70
      %s73 = sadd.s32 %s72, 1
      %p76 = scmp.eq.s32.totalorder %s17, 1
      %p77 = scmp.ne.s32.totalorder %s72, %s74
      %p78 = scmp.eq.s32.totalorder %s17, 0
      %p79 = por %p77, %p78
      %p80 = scmp.ne.s32.totalorder %s72, %s74
      %p81 = scmp.eq.s32.totalorder %s22, 1
      %p82 = por %p80, %p81
      %p83 = scmp.ne.s32.totalorder %s74, %s75
      %p84 = scmp.eq.s32.totalorder %s22, 0
      %p85 = por %p83, %p84
      %p86 = scmp.ne.s32.totalorder %s74, %s75
      %p87 = scmp.eq.s32.totalorder %s23, 1
      %p88 = por %p86, %p87
      %p90 = scmp.ne.s32.totalorder %s75, %s89
      %p91 = scmp.eq.s32.totalorder %s23, 0
      %p92 = por %p90, %p91
      %s94 = sadd.s32 %s93, 1
      %p97 = scmp.eq.s32.totalorder %s17, 1
      %p98 = scmp.ne.s32.totalorder %s93, %s95
      %p99 = scmp.eq.s32.totalorder %s17, 0
      %p100 = por %p98, %p99
      %p101 = scmp.ne.s32.totalorder %s93, %s95
      %p102 = scmp.eq.s32.totalorder %s22, 1
      %p103 = por %p101, %p102
      %p104 = scmp.ne.s32.totalorder %s95, %s96
      %p105 = scmp.eq.s32.totalorder %s22, 0
      %p106 = por %p104, %p105
      %p107 = scmp.ne.s32.totalorder %s95, %s96
      %p108 = scmp.eq.s32.totalorder %s23, 1
      %p109 = por %p107, %p108
      %p111 = scmp.ne.s32.totalorder %s96, %s110
      %p112 = scmp.eq.s32.totalorder %s23, 0
      %p113 = por %p111, %p112
      %s114 = ssub.s32 %s17, %s24
      %p115 = scmp.eq.s32.totalorder %s114, 0
      %s117 = sadd.s32 %s116, 1
      %s118 = scalar_select %p115, %s116, %s117
      %p121 = pneg %p115
      %p122 = scmp.eq.s32.totalorder %s17, 1
      %p123 = por %p121, %p122
      %p124 = scmp.ne.s32.totalorder %s116, %s119
      %p125 = scmp.eq.s32.totalorder %s17, 0
      %p126 = por %p124, %p125
      %p127 = scmp.ne.s32.totalorder %s116, %s119
      %p128 = scmp.eq.s32.totalorder %s22, 1
      %p129 = por %p127, %p128
      %p130 = scmp.ne.s32.totalorder %s119, %s120
      %p131 = scmp.eq.s32.totalorder %s22, 0
      %p132 = por %p130, %p131
      %p133 = scmp.ne.s32.totalorder %s119, %s120
      %p134 = scmp.eq.s32.totalorder %s23, 1
      %p135 = por %p133, %p134
      %p137 = scmp.ne.s32.totalorder %s120, %s136
      %p138 = scmp.eq.s32.totalorder %s23, 0
      %p139 = por %p137, %p138
      %p140 = scmp.le.s32.totalorder 1, %s17
      %p141 = scmp.lt.s32.totalorder %s17, 3
      %p142 = pnand %p140, %p141
      %p143 = pneg %p142
      // Predicated region
      $region9: #{tpu_custom_call.1} parent=5 // pred_check
        _
      $region10: #{tpu_custom_call.1} parent=5 // pred_check_branch
        %145 = sbr.rel (%p142) target = $region12
      $region11: #{tpu_custom_call.1} parent=5 // pred_region
        %s146 = ssub.s32 %s17, 1
        // Predicated region
        $region13: #{tpu_custom_call.1} parent=11 // pred_check
          %p147 = pneg %p64
        $region14: #{tpu_custom_call.1} parent=11 // pred_check_branch
          %149 = sbr.rel (%p147) target = $region16
        $region15: #{tpu_custom_call.1} parent=11 // pred_region
          %s151 = ssub.s32 512, 512
          %152 = vsyncadd [#allocation6], %s151
          %s153 = sshll.u32 [#allocation5], 4
          %s154 = int_to_ptr.vmem [resolvable:$true] %s153
          %159 = dma.hbm_to_vmem [thread:$0]  %s1, 512, %s154, [#allocation6], 128, 128, 8
        $region16: #{tpu_custom_call.1} parent=11 // pred_fallthru
          _
        // Predicated region
        $region17: #{tpu_custom_call.1} parent=11 // pred_check
          %p160 = pneg %p85
        $region18: #{tpu_custom_call.1} parent=11 // pred_check_branch
          %162 = sbr.rel (%p160) target = $region20
        $region19: #{tpu_custom_call.1} parent=11 // pred_region
          %s164 = ssub.s32 512, 512
          %165 = vsyncadd [#allocation6], %s164
          %s166 = sshll.u32 [#allocation7], 4
          %s167 = int_to_ptr.vmem [resolvable:$true] %s166
          %172 = dma.hbm_to_vmem [thread:$0]  %s2, 512, %s167, [#allocation6], 128, 128, 8
        $region20: #{tpu_custom_call.1} parent=11 // pred_fallthru
          _
        // Predicated region
        $region21: #{tpu_custom_call.1} parent=11 // pred_check
          %p173 = pneg %p106
        $region22: #{tpu_custom_call.1} parent=11 // pred_check_branch
          %175 = sbr.rel (%p173) target = $region24
        $region23: #{tpu_custom_call.1} parent=11 // pred_region
          _
        $region24: #{tpu_custom_call.1} parent=11 // pred_fallthru
          _
      $region12: #{tpu_custom_call.1} parent=5 // pred_fallthru
        _
      %p176 = scmp.lt.s32.totalorder %s17, 2
      // Predicated region
      $region25: #{tpu_custom_call.1} parent=5 // pred_check
        %p177 = pneg %p176
      $region26: #{tpu_custom_call.1} parent=5 // pred_check_branch
        %179 = sbr.rel (%p177) target = $region28
      $region27: #{tpu_custom_call.1} parent=5 // pred_region
        // Predicated region
        $region29: #{tpu_custom_call.1} parent=27 // pred_check
          %p180 = pneg %p37
        $region30: #{tpu_custom_call.1} parent=27 // pred_check_branch
          %182 = sbr.rel (%p180) target = $region32
        $region31: #{tpu_custom_call.1} parent=27 // pred_region
          %s183 = sand.u32 %s27, 1
          %s184 = scalar_lea.sflag [#allocation3], %s183
          %s185 = sand.u32 %s27, 1
          %s186 = smul.addr %s185, 8
          %s187 = scalar_lea.vmem [#allocation2], %s186
          %s189 = ssub.s32 128, 128
          %190 = vsyncadd %s184, %s189
          %s191 = smul.addr %s17, 128
          %s192 = scalar_lea.hbm %s0, %s191
          %s194 = sshll.u32 %s187, 4
          %s195 = int_to_ptr.vmem [resolvable:$true] %s194
          %197 = dma.hbm_to_vmem [thread:$0]  %s192, 128, %s195, %s184
        $region32: #{tpu_custom_call.1} parent=27 // pred_fallthru
          _
      $region28: #{tpu_custom_call.1} parent=5 // pred_fallthru
        _
      %p198 = scmp.le.s32.totalorder 1, %s17
      %p199 = scmp.lt.s32.totalorder %s17, 3
      %p200 = pnand %p198, %p199
      %p201 = pneg %p200
      // Predicated region
      $region33: #{tpu_custom_call.1} parent=5 // pred_check
        _
      $region34: #{tpu_custom_call.1} parent=5 // pred_check_branch
        %203 = sbr.rel (%p200) target = $region36
      $region35: #{tpu_custom_call.1} parent=5 // pred_region
        %s204 = ssub.s32 %s17, 1
        %s205 = sand.u32 %s30, 1
        %s206 = scalar_lea.sflag [#allocation3], %s205
        %s207 = sand.u32 %s30, 1
        %s208 = smul.addr %s207, 8
        %s209 = scalar_lea.vmem [#allocation2], %s208
        // Predicated region
        $region37: #{tpu_custom_call.1} parent=35 // pred_check
          %p210 = pneg %p43
        $region38: #{tpu_custom_call.1} parent=35 // pred_check_branch
          %212 = sbr.rel (%p210) target = $region40
        $region39: #{tpu_custom_call.1} parent=35 // pred_region
          %213 = dma.done %s206, 128
        $region40: #{tpu_custom_call.1} parent=35 // pred_fallthru
          _
        // Predicated region
        $region41: #{tpu_custom_call.1} parent=35 // pred_check
          %p214 = pneg %p64
        $region42: #{tpu_custom_call.1} parent=35 // pred_check_branch
          %216 = sbr.rel (%p214) target = $region44
        $region43: #{tpu_custom_call.1} parent=35 // pred_region
          %217 = dma.done [#allocation6], 512
        $region44: #{tpu_custom_call.1} parent=35 // pred_fallthru
          _
        // Predicated region
        $region45: #{tpu_custom_call.1} parent=35 // pred_check
          %p218 = pneg %p85
        $region46: #{tpu_custom_call.1} parent=35 // pred_check_branch
          %220 = sbr.rel (%p218) target = $region48
        $region47: #{tpu_custom_call.1} parent=35 // pred_region
          %221 = dma.done [#allocation6], 512
        $region48: #{tpu_custom_call.1} parent=35 // pred_fallthru
          _
        %s222 = sand.u32 %s30, 1
        %s223 = scalar_lea.sflag [#allocation3], %s222
        %s224 = sand.u32 %s30, 1
        %s225 = smul.addr %s224, 8
        %s226 = scalar_lea.vmem [#allocation2], %s225
        %p227 = pneg %p43
        %p228 = pneg %p40
        %p229 = pneg %p64
        %p230 = pneg %p61
        %p231 = pneg %p85
        %p232 = pneg %p82
        %p233 = pneg %p106
        %p234 = pneg %p103
        %p235 = pneg %p132
        %p236 = pneg %p129
        %s237 = sand.u32 %s119, 1
        %s238 = scalar_lea.sflag [#allocation4], %s237
        %s239 = sand.u32 %s119, 1
        %s240 = smul.addr %s239, 8
        %s241 = scalar_lea.vmem [#allocation8], %s240
        %v242 = vld [vmem:[%s209] sm:$0xff]
        %v243 = vld [vmem:[%s3] sm:$0x1]
        %v244 = vld [vmem:[#allocation5] sm:$0xff]
        %v245 = vld [vmem:[#allocation5 + $0x8] sm:$0xff]
        %v246 = vld [vmem:[#allocation5 + $0x10] sm:$0xff]
        %v247 = vld [vmem:[#allocation5 + $0x18] sm:$0xff]
        %v249 = vlaneseq
        %v250 = vshrl.u32 %v249, 7
        %v251 = vsub.s32 0, %v250
        %v252 = vrot.slane %v243, %v251
        %vm254 = vcmask 261120
        %v256 = vsel %vm254, %v242, 0
        %258 = vmatprep.subr.mxu0 0.0
        %259 = vmatpush1.msra.mxu0 %v244
        %260 = vmatprep.subr.mxu0 0.0
        %261 = vmatpush1.msra.mxu0 %v245
        %262 = vmatprep.subr.mxu0 0.0
        %263 = vmatpush1.msra.mxu0 %v246
        %264 = vmatprep.subr.mxu0 0.0
        %265 = vmatpush1.msra.mxu0 %v247
        %266 = vmatprep.subr.mxu0 0.0
        %267 = vmatpush1.msra.mxu0 0.0
        %268 = vmatprep.subr.mxu0 0.0
        %269 = vmatpush1.msra.mxu0 0.0
        %270 = vmatprep.subr.mxu0 0.0
        %271 = vmatpush1.msra.mxu0 0.0
        %272 = vmatprep.subr.mxu0 0.0
        %273 = vmatpush1.msra.mxu0 0.0
        %274 = vmatprep.subr.mxu0 0.0
        %275 = vmatpush1.msra.mxu0 0.0
        %276 = vmatprep.subr.mxu0 0.0
        %277 = vmatpush1.msra.mxu0 0.0
        %278 = vmatprep.subr.mxu0 0.0
        %279 = vmatpush1.msra.mxu0 0.0
        %280 = vmatprep.subr.mxu0 0.0
        %281 = vmatpush1.msra.mxu0 0.0
        %282 = vmatprep.subr.mxu0 0.0
        %283 = vmatpush1.msra.mxu0 0.0
        %284 = vmatprep.subr.mxu0 0.0
        %285 = vmatpush1.msra.mxu0 0.0
        %286 = vmatprep.subr.mxu0 0.0
        %287 = vmatpush1.msra.mxu0 0.0
        %288 = vmatprep.subr.mxu0 0.0
        %289 = vmatpush1.msra.mxu0 0.0
        %290 = vmatprep.subr.mxu0 0.0
        %291 = vmatpush1.msra.mxu0 0.0
        %292 = vmatprep.subr.mxu0 0.0
        %293 = vmatpush1.msra.mxu0 0.0
        %294 = vmatprep.subr.mxu0 0.0
        %295 = vmatpush1.msra.mxu0 0.0
        %296 = vmatprep.subr.mxu0 0.0
        %297 = vmatpush1.msra.mxu0 0.0
        %298 = vmatprep.subr.mxu0 0.0
        %299 = vmatpush1.msra.mxu0 0.0
        %300 = vmatprep.subr.mxu0 0.0
        %301 = vmatpush1.msra.mxu0 0.0
        %302 = vmatprep.subr.mxu0 0.0
        %303 = vmatpush1.msra.mxu0 0.0
        %304 = vmatprep.subr.mxu0 0.0
        %305 = vmatpush1.msra.mxu0 0.0
        %306 = vmatprep.subr.mxu0 0.0
        %307 = vmatpush1.msra.mxu0 0.0
        %308 = vmatprep.subr.mxu0 0.0
        %309 = vmatpush1.msra.mxu0 0.0
        %310 = vmatprep.subr.mxu0 0.0
        %311 = vmatpush1.msra.mxu0 0.0
        %312 = vmatprep.subr.mxu0 0.0
        %313 = vmatpush1.msra.mxu0 0.0
        %314 = vmatprep.subr.mxu0 0.0
        %315 = vmatpush1.msra.mxu0 0.0
        %316 = vmatprep.subr.mxu0 0.0
        %317 = vmatpush1.msra.mxu0 0.0
        %318 = vmatprep.subr.mxu0 0.0
        %319 = vmatpush1.msra.mxu0 0.0
        %320 = vmatprep.subr.mxu0 0.0
        %321 = vmatpush1.msra.mxu0 0.0
        %322 = vmatprep.mubr.f32.mxu0 0.0
        %323 = vmatmul.mubr.f32.gmra.mrb[0].mxu0 %v256
        %v324 = vpop.f32.mrb[0].mxu0
        %v325 = vadd.f32 %v252, %v324
        %v326 = vpop.f32.mrb[0].mxu0
        %327 = vdwg.mxu0
        %v328 = vlaneseq
        %v329 = vshrl.u32 %v328, 7
        %v330 = vlaneseq
        %v331 = vand.u32 %v330, 127
        %vm332 = vcmp.le.s32.totalorder %v331, %v329
        %v333 = vsub.s32 %v329, 3
        %vm334 = vcmp.gt.s32.totalorder %v331, %v333
        %vm335 = vmand %vm332, %vm334
        %337 = vrot.lane.b32.xlu0 %v325, 96
        %v338 = vpop.permute.xlu0 %337
        %vm339 = vcmask 64512
        %v340 = vsel %vm339, %v325, 0
        %v342 = vsel %vm339, %v338, 0
        %344 = vmatprep.subr.mxu0 0.0
        %345 = vmatpush1.xpose.msra.mxu0 %v342
        %346 = vmatprep.subr.mxu0 0.0
        %347 = vmatpush1.xpose.msra.mxu0 0.0
        %348 = vmatprep.subr.mxu0 0.0
        %349 = vmatpush1.xpose.msra.mxu0 0.0
        %350 = vmatprep.subr.mxu0 0.0
        %351 = vmatpush1.xpose.msra.mxu0 0.0
        %352 = vmatprep.subr.mxu0 0.0
        %353 = vmatpush1.xpose.msra.mxu0 0.0
        %354 = vmatprep.subr.mxu0 0.0
        %355 = vmatpush1.xpose.msra.mxu0 0.0
        %356 = vmatprep.subr.mxu0 0.0
        %357 = vmatpush1.xpose.msra.mxu0 0.0
        %358 = vmatprep.subr.mxu0 0.0
        %359 = vmatpush1.xpose.msra.mxu0 0.0
        %360 = vmatprep.subr.mxu0 0.0
        %361 = vmatpush1.xpose.msra.mxu0 0.0
        %362 = vmatprep.subr.mxu0 0.0
        %363 = vmatpush1.xpose.msra.mxu0 0.0
        %364 = vmatprep.subr.mxu0 0.0
        %365 = vmatpush1.xpose.msra.mxu0 0.0
        %366 = vmatprep.subr.mxu0 0.0
        %367 = vmatpush1.xpose.msra.mxu0 0.0
        %368 = vmatprep.subr.mxu0 0.0
        %369 = vmatpush1.xpose.msra.mxu0 0.0
        %370 = vmatprep.subr.mxu0 0.0
        %371 = vmatpush1.xpose.msra.mxu0 0.0
        %372 = vmatprep.subr.mxu0 0.0
        %373 = vmatpush1.xpose.msra.mxu0 0.0
        %374 = vmatprep.subr.mxu0 0.0
        %375 = vmatpush1.xpose.msra.mxu0 0.0
        %376 = vmatprep.subr.mxu0 0.0
        %377 = vmatpush1.xpose.msra.mxu0 0.0
        %378 = vmatprep.subr.mxu0 0.0
        %379 = vmatpush1.xpose.msra.mxu0 0.0
        %380 = vmatprep.subr.mxu0 0.0
        %381 = vmatpush1.xpose.msra.mxu0 0.0
        %382 = vmatprep.subr.mxu0 0.0
        %383 = vmatpush1.xpose.msra.mxu0 0.0
        %384 = vmatprep.subr.mxu0 0.0
        %385 = vmatpush1.xpose.msra.mxu0 0.0
        %386 = vmatprep.subr.mxu0 0.0
        %387 = vmatpush1.xpose.msra.mxu0 0.0
        %388 = vmatprep.subr.mxu0 0.0
        %389 = vmatpush1.xpose.msra.mxu0 0.0
        %390 = vmatprep.subr.mxu0 0.0
        %391 = vmatpush1.xpose.msra.mxu0 0.0
        %392 = vmatprep.subr.mxu0 0.0
        %393 = vmatpush1.xpose.msra.mxu0 0.0
        %394 = vmatprep.subr.mxu0 0.0
        %395 = vmatpush1.xpose.msra.mxu0 0.0
        %396 = vmatprep.subr.mxu0 0.0
        %397 = vmatpush1.xpose.msra.mxu0 0.0
        %398 = vmatprep.subr.mxu0 0.0
        %399 = vmatpush1.xpose.msra.mxu0 0.0
        %400 = vmatprep.subr.mxu0 0.0
        %401 = vmatpush1.xpose.msra.mxu0 0.0
        %402 = vmatprep.subr.mxu0 0.0
        %403 = vmatpush1.xpose.msra.mxu0 0.0
        %404 = vmatprep.subr.mxu0 0.0
        %405 = vmatpush1.xpose.msra.mxu0 0.0
        %406 = vmatprep.subr.mxu0 0.0
        %407 = vmatpush1.xpose.msra.mxu0 0.0
        %408 = vmatprep.mubr.f32.mxu0 0.0
        %409 = vmatmul.mubr.f32.gmra.mrb[0].mxu0 %v340
        %v410 = vpop.f32.mrb[0].mxu0
        %v411 = vadd.f32 0.0, %v410
        %v412 = vpop.f32.mrb[0].mxu0
        %413 = vdwg.mxu0
        %v414 = vmul.f32 %v411, 0.35355338
        %v415 = vsel %vm335, %v414, -inf
        %v416 = vsel %vm339, %v415, -inf
        %417 = vmax.xlane.f32.xlu0 %v416
        %v418 = vpop.xlane.xlu0 %417
        %v419 = vsub.f32 %v415, %v418
        %v420 = vmul.f32 %v419, 1.442695
        %v421 = vpow.pop %v420
        %v422 = vsel %vm339, %v421, 0.0
        %423 = vadd.xlane.f32.xlu0 %v422
        %v424 = vpop.xlane.xlu0 %423
        %v425 = vrcp.pop %v424
        %v426 = vmul.f32 %v421, %v425
        %427 = vrot.lane.b32.xlu0 %v325, 64
        %v428 = vpop.permute.xlu0 %427
        %v431 = vsel %vm339, %v426, 0
        %433 = vmatprep.subr.mxu0 0.0
        %434 = vmatpush1.msra.mxu0 %v428
        %435 = vmatprep.subr.mxu0 0.0
        %436 = vmatpush1.msra.mxu0 0.0
        %437 = vmatprep.subr.mxu0 0.0
        %438 = vmatpush1.msra.mxu0 0.0
        %439 = vmatprep.subr.mxu0 0.0
        %440 = vmatpush1.msra.mxu0 0.0
        %441 = vmatprep.subr.mxu0 0.0
        %442 = vmatpush1.msra.mxu0 0.0
        %443 = vmatprep.subr.mxu0 0.0
        %444 = vmatpush1.msra.mxu0 0.0
        %445 = vmatprep.subr.mxu0 0.0
        %446 = vmatpush1.msra.mxu0 0.0
        %447 = vmatprep.subr.mxu0 0.0
        %448 = vmatpush1.msra.mxu0 0.0
        %449 = vmatprep.subr.mxu0 0.0
        %450 = vmatpush1.msra.mxu0 0.0
        %451 = vmatprep.subr.mxu0 0.0
        %452 = vmatpush1.msra.mxu0 0.0
        %453 = vmatprep.subr.mxu0 0.0
        %454 = vmatpush1.msra.mxu0 0.0
        %455 = vmatprep.subr.mxu0 0.0
        %456 = vmatpush1.msra.mxu0 0.0
        %457 = vmatprep.subr.mxu0 0.0
        %458 = vmatpush1.msra.mxu0 0.0
        %459 = vmatprep.subr.mxu0 0.0
        %460 = vmatpush1.msra.mxu0 0.0
        %461 = vmatprep.subr.mxu0 0.0
        %462 = vmatpush1.msra.mxu0 0.0
        %463 = vmatprep.subr.mxu0 0.0
        %464 = vmatpush1.msra.mxu0 0.0
        %465 = vmatprep.subr.mxu0 0.0
        %466 = vmatpush1.msra.mxu0 0.0
        %467 = vmatprep.subr.mxu0 0.0
        %468 = vmatpush1.msra.mxu0 0.0
        %469 = vmatprep.subr.mxu0 0.0
        %470 = vmatpush1.msra.mxu0 0.0
        %471 = vmatprep.subr.mxu0 0.0
        %472 = vmatpush1.msra.mxu0 0.0
        %473 = vmatprep.subr.mxu0 0.0
        %474 = vmatpush1.msra.mxu0 0.0
        %475 = vmatprep.subr.mxu0 0.0
        %476 = vmatpush1.msra.mxu0 0.0
        %477 = vmatprep.subr.mxu0 0.0
        %478 = vmatpush1.msra.mxu0 0.0
        %479 = vmatprep.subr.mxu0 0.0
        %480 = vmatpush1.msra.mxu0 0.0
        %481 = vmatprep.subr.mxu0 0.0
        %482 = vmatpush1.msra.mxu0 0.0
        %483 = vmatprep.subr.mxu0 0.0
        %484 = vmatpush1.msra.mxu0 0.0
        %485 = vmatprep.subr.mxu0 0.0
        %486 = vmatpush1.msra.mxu0 0.0
        %487 = vmatprep.subr.mxu0 0.0
        %488 = vmatpush1.msra.mxu0 0.0
        %489 = vmatprep.subr.mxu0 0.0
        %490 = vmatpush1.msra.mxu0 0.0
        %491 = vmatprep.subr.mxu0 0.0
        %492 = vmatpush1.msra.mxu0 0.0
        %493 = vmatprep.subr.mxu0 0.0
        %494 = vmatpush1.msra.mxu0 0.0
        %495 = vmatprep.subr.mxu0 0.0
        %496 = vmatpush1.msra.mxu0 0.0
        %497 = vmatprep.mubr.f32.mxu0 0.0
        %498 = vmatmul.mubr.f32.gmra.mrb[0].mxu0 %v431
        %v499 = vpop.f32.mrb[0].mxu0
        %v500 = vadd.f32 0.0, %v499
        %v501 = vpop.f32.mrb[0].mxu0
        %502 = vdwg.mxu0
        %503 = vrot.lane.b32.xlu0 %v325, 120
        %v504 = vpop.permute.xlu0 %503
        %505 = vrot.lane.b32.xlu0 %v325, 88
        %v506 = vpop.permute.xlu0 %505
        %v507 = vsel %vm339, %v504, 0
        %v509 = vsel %vm339, %v506, 0
        %511 = vmatprep.subr.mxu0 0.0
        %512 = vmatpush1.xpose.msra.mxu0 %v509
        %513 = vmatprep.subr.mxu0 0.0
        %514 = vmatpush1.xpose.msra.mxu0 0.0
        %515 = vmatprep.subr.mxu0 0.0
        %516 = vmatpush1.xpose.msra.mxu0 0.0
        %517 = vmatprep.subr.mxu0 0.0
        %518 = vmatpush1.xpose.msra.mxu0 0.0
        %519 = vmatprep.subr.mxu0 0.0
        %520 = vmatpush1.xpose.msra.mxu0 0.0
        %521 = vmatprep.subr.mxu0 0.0
        %522 = vmatpush1.xpose.msra.mxu0 0.0
        %523 = vmatprep.subr.mxu0 0.0
        %524 = vmatpush1.xpose.msra.mxu0 0.0
        %525 = vmatprep.subr.mxu0 0.0
        %526 = vmatpush1.xpose.msra.mxu0 0.0
        %527 = vmatprep.subr.mxu0 0.0
        %528 = vmatpush1.xpose.msra.mxu0 0.0
        %529 = vmatprep.subr.mxu0 0.0
        %530 = vmatpush1.xpose.msra.mxu0 0.0
        %531 = vmatprep.subr.mxu0 0.0
        %532 = vmatpush1.xpose.msra.mxu0 0.0
        %533 = vmatprep.subr.mxu0 0.0
        %534 = vmatpush1.xpose.msra.mxu0 0.0
        %535 = vmatprep.subr.mxu0 0.0
        %536 = vmatpush1.xpose.msra.mxu0 0.0
        %537 = vmatprep.subr.mxu0 0.0
        %538 = vmatpush1.xpose.msra.mxu0 0.0
        %539 = vmatprep.subr.mxu0 0.0
        %540 = vmatpush1.xpose.msra.mxu0 0.0
        %541 = vmatprep.subr.mxu0 0.0
        %542 = vmatpush1.xpose.msra.mxu0 0.0
        %543 = vmatprep.subr.mxu0 0.0
        %544 = vmatpush1.xpose.msra.mxu0 0.0
        %545 = vmatprep.subr.mxu0 0.0
        %546 = vmatpush1.xpose.msra.mxu0 0.0
        %547 = vmatprep.subr.mxu0 0.0
        %548 = vmatpush1.xpose.msra.mxu0 0.0
        %549 = vmatprep.subr.mxu0 0.0
        %550 = vmatpush1.xpose.msra.mxu0 0.0
        %551 = vmatprep.subr.mxu0 0.0
        %552 = vmatpush1.xpose.msra.mxu0 0.0
        %553 = vmatprep.subr.mxu0 0.0
        %554 = vmatpush1.xpose.msra.mxu0 0.0
        %555 = vmatprep.subr.mxu0 0.0
        %556 = vmatpush1.xpose.msra.mxu0 0.0
        %557 = vmatprep.subr.mxu0 0.0
        %558 = vmatpush1.xpose.msra.mxu0 0.0
        %559 = vmatprep.subr.mxu0 0.0
        %560 = vmatpush1.xpose.msra.mxu0 0.0
        %561 = vmatprep.subr.mxu0 0.0
        %562 = vmatpush1.xpose.msra.mxu0 0.0
        %563 = vmatprep.subr.mxu0 0.0
        %564 = vmatpush1.xpose.msra.mxu0 0.0
        %565 = vmatprep.subr.mxu0 0.0
        %566 = vmatpush1.xpose.msra.mxu0 0.0
        %567 = vmatprep.subr.mxu0 0.0
        %568 = vmatpush1.xpose.msra.mxu0 0.0
        %569 = vmatprep.subr.mxu0 0.0
        %570 = vmatpush1.xpose.msra.mxu0 0.0
        %571 = vmatprep.subr.mxu0 0.0
        %572 = vmatpush1.xpose.msra.mxu0 0.0
        %573 = vmatprep.subr.mxu0 0.0
        %574 = vmatpush1.xpose.msra.mxu0 0.0
        %575 = vmatprep.mubr.f32.mxu0 0.0
        %576 = vmatmul.mubr.f32.gmra.mrb[0].mxu0 %v507
        %v577 = vpop.f32.mrb[0].mxu0
        %v578 = vadd.f32 0.0, %v577
        %v579 = vpop.f32.mrb[0].mxu0
        %580 = vdwg.mxu0
        %v581 = vmul.f32 %v578, 0.35355338
        %v582 = vsel %vm335, %v581, -inf
        %v583 = vsel %vm339, %v582, -inf
        %584 = vmax.xlane.f32.xlu0 %v583
        %v585 = vpop.xlane.xlu0 %584
        %v586 = vsub.f32 %v582, %v585
        %v587 = vmul.f32 %v586, 1.442695
        %v588 = vpow.pop %v587
        %v589 = vsel %vm339, %v588, 0.0
        %590 = vadd.xlane.f32.xlu0 %v589
        %v591 = vpop.xlane.xlu0 %590
        %v592 = vrcp.pop %v591
        %v593 = vmul.f32 %v588, %v592
        %594 = vrot.lane.b32.xlu0 %v325, 56
        %v595 = vpop.permute.xlu0 %594
        %v598 = vsel %vm339, %v593, 0
        %600 = vmatprep.subr.mxu0 0.0
        %601 = vmatpush1.msra.mxu0 %v595
        %602 = vmatprep.subr.mxu0 0.0
        %603 = vmatpush1.msra.mxu0 0.0
        %604 = vmatprep.subr.mxu0 0.0
        %605 = vmatpush1.msra.mxu0 0.0
        %606 = vmatprep.subr.mxu0 0.0
        %607 = vmatpush1.msra.mxu0 0.0
        %608 = vmatprep.subr.mxu0 0.0
        %609 = vmatpush1.msra.mxu0 0.0
        %610 = vmatprep.subr.mxu0 0.0
        %611 = vmatpush1.msra.mxu0 0.0
        %612 = vmatprep.subr.mxu0 0.0
        %613 = vmatpush1.msra.mxu0 0.0
        %614 = vmatprep.subr.mxu0 0.0
        %615 = vmatpush1.msra.mxu0 0.0
        %616 = vmatprep.subr.mxu0 0.0
        %617 = vmatpush1.msra.mxu0 0.0
        %618 = vmatprep.subr.mxu0 0.0
        %619 = vmatpush1.msra.mxu0 0.0
        %620 = vmatprep.subr.mxu0 0.0
        %621 = vmatpush1.msra.mxu0 0.0
        %622 = vmatprep.subr.mxu0 0.0
        %623 = vmatpush1.msra.mxu0 0.0
        %624 = vmatprep.subr.mxu0 0.0
        %625 = vmatpush1.msra.mxu0 0.0
        %626 = vmatprep.subr.mxu0 0.0
        %627 = vmatpush1.msra.mxu0 0.0
        %628 = vmatprep.subr.mxu0 0.0
        %629 = vmatpush1.msra.mxu0 0.0
        %630 = vmatprep.subr.mxu0 0.0
        %631 = vmatpush1.msra.mxu0 0.0
        %632 = vmatprep.subr.mxu0 0.0
        %633 = vmatpush1.msra.mxu0 0.0
        %634 = vmatprep.subr.mxu0 0.0
        %635 = vmatpush1.msra.mxu0 0.0
        %636 = vmatprep.subr.mxu0 0.0
        %637 = vmatpush1.msra.mxu0 0.0
        %638 = vmatprep.subr.mxu0 0.0
        %639 = vmatpush1.msra.mxu0 0.0
        %640 = vmatprep.subr.mxu0 0.0
        %641 = vmatpush1.msra.mxu0 0.0
        %642 = vmatprep.subr.mxu0 0.0
        %643 = vmatpush1.msra.mxu0 0.0
        %644 = vmatprep.subr.mxu0 0.0
        %645 = vmatpush1.msra.mxu0 0.0
        %646 = vmatprep.subr.mxu0 0.0
        %647 = vmatpush1.msra.mxu0 0.0
        %648 = vmatprep.subr.mxu0 0.0
        %649 = vmatpush1.msra.mxu0 0.0
        %650 = vmatprep.subr.mxu0 0.0
        %651 = vmatpush1.msra.mxu0 0.0
        %652 = vmatprep.subr.mxu0 0.0
        %653 = vmatpush1.msra.mxu0 0.0
        %654 = vmatprep.subr.mxu0 0.0
        %655 = vmatpush1.msra.mxu0 0.0
        %656 = vmatprep.subr.mxu0 0.0
        %657 = vmatpush1.msra.mxu0 0.0
        %658 = vmatprep.subr.mxu0 0.0
        %659 = vmatpush1.msra.mxu0 0.0
        %660 = vmatprep.subr.mxu0 0.0
        %661 = vmatpush1.msra.mxu0 0.0
        %662 = vmatprep.subr.mxu0 0.0
        %663 = vmatpush1.msra.mxu0 0.0
        %664 = vmatprep.mubr.f32.mxu0 0.0
        %665 = vmatmul.mubr.f32.gmra.mrb[0].mxu0 %v598
        %v666 = vpop.f32.mrb[0].mxu0
        %v667 = vadd.f32 0.0, %v666
        %v668 = vpop.f32.mrb[0].mxu0
        %669 = vdwg.mxu0
        %670 = vrot.lane.b32.xlu0 %v325, 112
        %v671 = vpop.permute.xlu0 %670
        %672 = vrot.lane.b32.xlu0 %v325, 80
        %v673 = vpop.permute.xlu0 %672
        %v674 = vsel %vm339, %v671, 0
        %v676 = vsel %vm339, %v673, 0
        %678 = vmatprep.subr.mxu0 0.0
        %679 = vmatpush1.xpose.msra.mxu0 %v676
        %680 = vmatprep.subr.mxu0 0.0
        %681 = vmatpush1.xpose.msra.mxu0 0.0
        %682 = vmatprep.subr.mxu0 0.0
        %683 = vmatpush1.xpose.msra.mxu0 0.0
        %684 = vmatprep.subr.mxu0 0.0
        %685 = vmatpush1.xpose.msra.mxu0 0.0
        %686 = vmatprep.subr.mxu0 0.0
        %687 = vmatpush1.xpose.msra.mxu0 0.0
        %688 = vmatprep.subr.mxu0 0.0
        %689 = vmatpush1.xpose.msra.mxu0 0.0
        %690 = vmatprep.subr.mxu0 0.0
        %691 = vmatpush1.xpose.msra.mxu0 0.0
        %692 = vmatprep.subr.mxu0 0.0
        %693 = vmatpush1.xpose.msra.mxu0 0.0
        %694 = vmatprep.subr.mxu0 0.0
        %695 = vmatpush1.xpose.msra.mxu0 0.0
        %696 = vmatprep.subr.mxu0 0.0
        %697 = vmatpush1.xpose.msra.mxu0 0.0
        %698 = vmatprep.subr.mxu0 0.0
        %699 = vmatpush1.xpose.msra.mxu0 0.0
        %700 = vmatprep.subr.mxu0 0.0
        %701 = vmatpush1.xpose.msra.mxu0 0.0
        %702 = vmatprep.subr.mxu0 0.0
        %703 = vmatpush1.xpose.msra.mxu0 0.0
        %704 = vmatprep.subr.mxu0 0.0
        %705 = vmatpush1.xpose.msra.mxu0 0.0
        %706 = vmatprep.subr.mxu0 0.0
        %707 = vmatpush1.xpose.msra.mxu0 0.0
        %708 = vmatprep.subr.mxu0 0.0
        %709 = vmatpush1.xpose.msra.mxu0 0.0
        %710 = vmatprep.subr.mxu0 0.0
        %711 = vmatpush1.xpose.msra.mxu0 0.0
        %712 = vmatprep.subr.mxu0 0.0
        %713 = vmatpush1.xpose.msra.mxu0 0.0
        %714 = vmatprep.subr.mxu0 0.0
        %715 = vmatpush1.xpose.msra.mxu0 0.0
        %716 = vmatprep.subr.mxu0 0.0
        %717 = vmatpush1.xpose.msra.mxu0 0.0
        %718 = vmatprep.subr.mxu0 0.0
        %719 = vmatpush1.xpose.msra.mxu0 0.0
        %720 = vmatprep.subr.mxu0 0.0
        %721 = vmatpush1.xpose.msra.mxu0 0.0
        %722 = vmatprep.subr.mxu0 0.0
        %723 = vmatpush1.xpose.msra.mxu0 0.0
        %724 = vmatprep.subr.mxu0 0.0
        %725 = vmatpush1.xpose.msra.mxu0 0.0
        %726 = vmatprep.subr.mxu0 0.0
        %727 = vmatpush1.xpose.msra.mxu0 0.0
        %728 = vmatprep.subr.mxu0 0.0
        %729 = vmatpush1.xpose.msra.mxu0 0.0
        %730 = vmatprep.subr.mxu0 0.0
        %731 = vmatpush1.xpose.msra.mxu0 0.0
        %732 = vmatprep.subr.mxu0 0.0
        %733 = vmatpush1.xpose.msra.mxu0 0.0
        %734 = vmatprep.subr.mxu0 0.0
        %735 = vmatpush1.xpose.msra.mxu0 0.0
        %736 = vmatprep.subr.mxu0 0.0
        %737 = vmatpush1.xpose.msra.mxu0 0.0
        %738 = vmatprep.subr.mxu0 0.0
        %739 = vmatpush1.xpose.msra.mxu0 0.0
        %740 = vmatprep.subr.mxu0 0.0
        %741 = vmatpush1.xpose.msra.mxu0 0.0
        %742 = vmatprep.mubr.f32.mxu0 0.0
        %743 = vmatmul.mubr.f32.gmra.mrb[0].mxu0 %v674
        %v744 = vpop.f32.mrb[0].mxu0
        %v745 = vadd.f32 0.0, %v744
        %v746 = vpop.f32.mrb[0].mxu0
        %747 = vdwg.mxu0
        %v748 = vmul.f32 %v745, 0.35355338
        %v749 = vsel %vm335, %v748, -inf
        %v750 = vsel %vm339, %v749, -inf
        %751 = vmax.xlane.f32.xlu0 %v750
        %v752 = vpop.xlane.xlu0 %751
        %v753 = vsub.f32 %v749, %v752
        %v754 = vmul.f32 %v753, 1.442695
        %v755 = vpow.pop %v754
        %v756 = vsel %vm339, %v755, 0.0
        %757 = vadd.xlane.f32.xlu0 %v756
        %v758 = vpop.xlane.xlu0 %757
        %v759 = vrcp.pop %v758
        %v760 = vmul.f32 %v755, %v759
        %761 = vrot.lane.b32.xlu0 %v325, 48
        %v762 = vpop.permute.xlu0 %761
        %v765 = vsel %vm339, %v760, 0
        %767 = vmatprep.subr.mxu0 0.0
        %768 = vmatpush1.msra.mxu0 %v762
        %769 = vmatprep.subr.mxu0 0.0
        %770 = vmatpush1.msra.mxu0 0.0
        %771 = vmatprep.subr.mxu0 0.0
        %772 = vmatpush1.msra.mxu0 0.0
        %773 = vmatprep.subr.mxu0 0.0
        %774 = vmatpush1.msra.mxu0 0.0
        %775 = vmatprep.subr.mxu0 0.0
        %776 = vmatpush1.msra.mxu0 0.0
        %777 = vmatprep.subr.mxu0 0.0
        %778 = vmatpush1.msra.mxu0 0.0
        %779 = vmatprep.subr.mxu0 0.0
        %780 = vmatpush1.msra.mxu0 0.0
        %781 = vmatprep.subr.mxu0 0.0
        %782 = vmatpush1.msra.mxu0 0.0
        %783 = vmatprep.subr.mxu0 0.0
        %784 = vmatpush1.msra.mxu0 0.0
        %785 = vmatprep.subr.mxu0 0.0
        %786 = vmatpush1.msra.mxu0 0.0
        %787 = vmatprep.subr.mxu0 0.0
        %788 = vmatpush1.msra.mxu0 0.0
        %789 = vmatprep.subr.mxu0 0.0
        %790 = vmatpush1.msra.mxu0 0.0
        %791 = vmatprep.subr.mxu0 0.0
        %792 = vmatpush1.msra.mxu0 0.0
        %793 = vmatprep.subr.mxu0 0.0
        %794 = vmatpush1.msra.mxu0 0.0
        %795 = vmatprep.subr.mxu0 0.0
        %796 = vmatpush1.msra.mxu0 0.0
        %797 = vmatprep.subr.mxu0 0.0
        %798 = vmatpush1.msra.mxu0 0.0
        %799 = vmatprep.subr.mxu0 0.0
        %800 = vmatpush1.msra.mxu0 0.0
        %801 = vmatprep.subr.mxu0 0.0
        %802 = vmatpush1.msra.mxu0 0.0
        %803 = vmatprep.subr.mxu0 0.0
        %804 = vmatpush1.msra.mxu0 0.0
        %805 = vmatprep.subr.mxu0 0.0
        %806 = vmatpush1.msra.mxu0 0.0
        %807 = vmatprep.subr.mxu0 0.0
        %808 = vmatpush1.msra.mxu0 0.0
        %809 = vmatprep.subr.mxu0 0.0
        %810 = vmatpush1.msra.mxu0 0.0
        %811 = vmatprep.subr.mxu0 0.0
        %812 = vmatpush1.msra.mxu0 0.0
        %813 = vmatprep.subr.mxu0 0.0
        %814 = vmatpush1.msra.mxu0 0.0
        %815 = vmatprep.subr.mxu0 0.0
        %816 = vmatpush1.msra.mxu0 0.0
        %817 = vmatprep.subr.mxu0 0.0
        %818 = vmatpush1.msra.mxu0 0.0
        %819 = vmatprep.subr.mxu0 0.0
        %820 = vmatpush1.msra.mxu0 0.0
        %821 = vmatprep.subr.mxu0 0.0
        %822 = vmatpush1.msra.mxu0 0.0
        %823 = vmatprep.subr.mxu0 0.0
        %824 = vmatpush1.msra.mxu0 0.0
        %825 = vmatprep.subr.mxu0 0.0
        %826 = vmatpush1.msra.mxu0 0.0
        %827 = vmatprep.subr.mxu0 0.0
        %828 = vmatpush1.msra.mxu0 0.0
        %829 = vmatprep.subr.mxu0 0.0
        %830 = vmatpush1.msra.mxu0 0.0
        %831 = vmatprep.mubr.f32.mxu0 0.0
        %832 = vmatmul.mubr.f32.gmra.mrb[0].mxu0 %v765
        %v833 = vpop.f32.mrb[0].mxu0
        %v834 = vadd.f32 0.0, %v833
        %v835 = vpop.f32.mrb[0].mxu0
        %836 = vdwg.mxu0
        %837 = vrot.lane.b32.xlu0 %v325, 104
        %v838 = vpop.permute.xlu0 %837
        %839 = vrot.lane.b32.xlu0 %v325, 72
        %v840 = vpop.permute.xlu0 %839
        %v841 = vsel %vm339, %v838, 0
        %v843 = vsel %vm339, %v840, 0
        %845 = vmatprep.subr.mxu0 0.0
        %846 = vmatpush1.xpose.msra.mxu0 %v843
        %847 = vmatprep.subr.mxu0 0.0
        %848 = vmatpush1.xpose.msra.mxu0 0.0
        %849 = vmatprep.subr.mxu0 0.0
        %850 = vmatpush1.xpose.msra.mxu0 0.0
        %851 = vmatprep.subr.mxu0 0.0
        %852 = vmatpush1.xpose.msra.mxu0 0.0
        %853 = vmatprep.subr.mxu0 0.0
        %854 = vmatpush1.xpose.msra.mxu0 0.0
        %855 = vmatprep.subr.mxu0 0.0
        %856 = vmatpush1.xpose.msra.mxu0 0.0
        %857 = vmatprep.subr.mxu0 0.0
        %858 = vmatpush1.xpose.msra.mxu0 0.0
        %859 = vmatprep.subr.mxu0 0.0
        %860 = vmatpush1.xpose.msra.mxu0 0.0
        %861 = vmatprep.subr.mxu0 0.0
        %862 = vmatpush1.xpose.msra.mxu0 0.0
        %863 = vmatprep.subr.mxu0 0.0
        %864 = vmatpush1.xpose.msra.mxu0 0.0
        %865 = vmatprep.subr.mxu0 0.0
        %866 = vmatpush1.xpose.msra.mxu0 0.0
        %867 = vmatprep.subr.mxu0 0.0
        %868 = vmatpush1.xpose.msra.mxu0 0.0
        %869 = vmatprep.subr.mxu0 0.0
        %870 = vmatpush1.xpose.msra.mxu0 0.0
        %871 = vmatprep.subr.mxu0 0.0
        %872 = vmatpush1.xpose.msra.mxu0 0.0
        %873 = vmatprep.subr.mxu0 0.0
        %874 = vmatpush1.xpose.msra.mxu0 0.0
        %875 = vmatprep.subr.mxu0 0.0
        %876 = vmatpush1.xpose.msra.mxu0 0.0
        %877 = vmatprep.subr.mxu0 0.0
        %878 = vmatpush1.xpose.msra.mxu0 0.0
        %879 = vmatprep.subr.mxu0 0.0
        %880 = vmatpush1.xpose.msra.mxu0 0.0
        %881 = vmatprep.subr.mxu0 0.0
        %882 = vmatpush1.xpose.msra.mxu0 0.0
        %883 = vmatprep.subr.mxu0 0.0
        %884 = vmatpush1.xpose.msra.mxu0 0.0
        %885 = vmatprep.subr.mxu0 0.0
        %886 = vmatpush1.xpose.msra.mxu0 0.0
        %887 = vmatprep.subr.mxu0 0.0
        %888 = vmatpush1.xpose.msra.mxu0 0.0
        %889 = vmatprep.subr.mxu0 0.0
        %890 = vmatpush1.xpose.msra.mxu0 0.0
        %891 = vmatprep.subr.mxu0 0.0
        %892 = vmatpush1.xpose.msra.mxu0 0.0
        %893 = vmatprep.subr.mxu0 0.0
        %894 = vmatpush1.xpose.msra.mxu0 0.0
        %895 = vmatprep.subr.mxu0 0.0
        %896 = vmatpush1.xpose.msra.mxu0 0.0
        %897 = vmatprep.subr.mxu0 0.0
        %898 = vmatpush1.xpose.msra.mxu0 0.0
        %899 = vmatprep.subr.mxu0 0.0
        %900 = vmatpush1.xpose.msra.mxu0 0.0
        %901 = vmatprep.subr.mxu0 0.0
        %902 = vmatpush1.xpose.msra.mxu0 0.0
        %903 = vmatprep.subr.mxu0 0.0
        %904 = vmatpush1.xpose.msra.mxu0 0.0
        %905 = vmatprep.subr.mxu0 0.0
        %906 = vmatpush1.xpose.msra.mxu0 0.0
        %907 = vmatprep.subr.mxu0 0.0
        %908 = vmatpush1.xpose.msra.mxu0 0.0
        %909 = vmatprep.mubr.f32.mxu0 0.0
        %910 = vmatmul.mubr.f32.gmra.mrb[0].mxu0 %v841
        %v911 = vpop.f32.mrb[0].mxu0
        %v912 = vadd.f32 0.0, %v911
        %v913 = vpop.f32.mrb[0].mxu0
        %914 = vdwg.mxu0
        %v915 = vmul.f32 %v912, 0.35355338
        %v916 = vsel %vm335, %v915, -inf
        %v917 = vsel %vm339, %v916, -inf
        %918 = vmax.xlane.f32.xlu0 %v917
        %v919 = vpop.xlane.xlu0 %918
        %v920 = vsub.f32 %v916, %v919
        %v921 = vmul.f32 %v920, 1.442695
        %v922 = vpow.pop %v921
        %v923 = vsel %vm339, %v922, 0.0
        %924 = vadd.xlane.f32.xlu0 %v923
        %v925 = vpop.xlane.xlu0 %924
        %v926 = vrcp.pop %v925
        %v927 = vmul.f32 %v922, %v926
        %928 = vrot.lane.b32.xlu0 %v325, 40
        %v929 = vpop.permute.xlu0 %928
        %v932 = vsel %vm339, %v927, 0
        %934 = vmatprep.subr.mxu0 0.0
        %935 = vmatpush1.msra.mxu0 %v929
        %936 = vmatprep.subr.mxu0 0.0
        %937 = vmatpush1.msra.mxu0 0.0
        %938 = vmatprep.subr.mxu0 0.0
        %939 = vmatpush1.msra.mxu0 0.0
        %940 = vmatprep.subr.mxu0 0.0
        %941 = vmatpush1.msra.mxu0 0.0
        %942 = vmatprep.subr.mxu0 0.0
        %943 = vmatpush1.msra.mxu0 0.0
        %944 = vmatprep.subr.mxu0 0.0
        %945 = vmatpush1.msra.mxu0 0.0
        %946 = vmatprep.subr.mxu0 0.0
        %947 = vmatpush1.msra.mxu0 0.0
        %948 = vmatprep.subr.mxu0 0.0
        %949 = vmatpush1.msra.mxu0 0.0
        %950 = vmatprep.subr.mxu0 0.0
        %951 = vmatpush1.msra.mxu0 0.0
        %952 = vmatprep.subr.mxu0 0.0
        %953 = vmatpush1.msra.mxu0 0.0
        %954 = vmatprep.subr.mxu0 0.0
        %955 = vmatpush1.msra.mxu0 0.0
        %956 = vmatprep.subr.mxu0 0.0
        %957 = vmatpush1.msra.mxu0 0.0
        %958 = vmatprep.subr.mxu0 0.0
        %959 = vmatpush1.msra.mxu0 0.0
        %960 = vmatprep.subr.mxu0 0.0
        %961 = vmatpush1.msra.mxu0 0.0
        %962 = vmatprep.subr.mxu0 0.0
        %963 = vmatpush1.msra.mxu0 0.0
        %964 = vmatprep.subr.mxu0 0.0
        %965 = vmatpush1.msra.mxu0 0.0
        %966 = vmatprep.subr.mxu0 0.0
        %967 = vmatpush1.msra.mxu0 0.0
        %968 = vmatprep.subr.mxu0 0.0
        %969 = vmatpush1.msra.mxu0 0.0
        %970 = vmatprep.subr.mxu0 0.0
        %971 = vmatpush1.msra.mxu0 0.0
        %972 = vmatprep.subr.mxu0 0.0
        %973 = vmatpush1.msra.mxu0 0.0
        %974 = vmatprep.subr.mxu0 0.0
        %975 = vmatpush1.msra.mxu0 0.0
        %976 = vmatprep.subr.mxu0 0.0
        %977 = vmatpush1.msra.mxu0 0.0
        %978 = vmatprep.subr.mxu0 0.0
        %979 = vmatpush1.msra.mxu0 0.0
        %980 = vmatprep.subr.mxu0 0.0
        %981 = vmatpush1.msra.mxu0 0.0
        %982 = vmatprep.subr.mxu0 0.0
        %983 = vmatpush1.msra.mxu0 0.0
        %984 = vmatprep.subr.mxu0 0.0
        %985 = vmatpush1.msra.mxu0 0.0
        %986 = vmatprep.subr.mxu0 0.0
        %987 = vmatpush1.msra.mxu0 0.0
        %988 = vmatprep.subr.mxu0 0.0
        %989 = vmatpush1.msra.mxu0 0.0
        %990 = vmatprep.subr.mxu0 0.0
        %991 = vmatpush1.msra.mxu0 0.0
        %992 = vmatprep.subr.mxu0 0.0
        %993 = vmatpush1.msra.mxu0 0.0
        %994 = vmatprep.subr.mxu0 0.0
        %995 = vmatpush1.msra.mxu0 0.0
        %996 = vmatprep.subr.mxu0 0.0
        %997 = vmatpush1.msra.mxu0 0.0
        %998 = vmatprep.mubr.f32.mxu0 0.0
        %999 = vmatmul.mubr.f32.gmra.mrb[0].mxu0 %v932
        %v1000 = vpop.f32.mrb[0].mxu0
        %v1001 = vadd.f32 0.0, %v1000
        %v1002 = vpop.f32.mrb[0].mxu0
        %1003 = vdwg.mxu0
        %1005 = vrot.lane.b32.xlu0 %v667, 8
        %v1006 = vpop.permute.xlu0 %1005
        %1009 = vrot.lane.b32.xlu0 %v834, 16
        %v1010 = vpop.permute.xlu0 %1009
        %1013 = vrot.lane.b32.xlu0 %v1001, 24
        %v1014 = vpop.permute.xlu0 %1013
        %v1016 = vsel %vm339, %v500, %v1006
        %vm1017 = vcmask 130048
        %v1018 = vsel %vm1017, %v1016, %v1010
        %vm1019 = vcmask 195584
        %v1020 = vsel %vm1019, %v1018, %v1014
        %v1021 = vld [vmem:[#allocation7] sm:$0xff]
        %v1022 = vld [vmem:[#allocation7 + $0x8] sm:$0xff]
        %v1023 = vld [vmem:[#allocation7 + $0x10] sm:$0xff]
        %v1024 = vld [vmem:[#allocation7 + $0x18] sm:$0xff]
        %1025 = vrot.lane.b32.xlu0 %v252, 32
        %v1026 = vpop.permute.xlu0 %1025
        %v1029 = vsel %vm254, %v1020, 0
        %1031 = vmatprep.subr.mxu0 0.0
        %1032 = vmatpush1.msra.mxu0 %v1021
        %1033 = vmatprep.subr.mxu0 0.0
        %1034 = vmatpush1.msra.mxu0 %v1022
        %1035 = vmatprep.subr.mxu0 0.0
        %1036 = vmatpush1.msra.mxu0 %v1023
        %1037 = vmatprep.subr.mxu0 0.0
        %1038 = vmatpush1.msra.mxu0 %v1024
        %1039 = vmatprep.subr.mxu0 0.0
        %1040 = vmatpush1.msra.mxu0 0.0
        %1041 = vmatprep.subr.mxu0 0.0
        %1042 = vmatpush1.msra.mxu0 0.0
        %1043 = vmatprep.subr.mxu0 0.0
        %1044 = vmatpush1.msra.mxu0 0.0
        %1045 = vmatprep.subr.mxu0 0.0
        %1046 = vmatpush1.msra.mxu0 0.0
        %1047 = vmatprep.subr.mxu0 0.0
        %1048 = vmatpush1.msra.mxu0 0.0
        %1049 = vmatprep.subr.mxu0 0.0
        %1050 = vmatpush1.msra.mxu0 0.0
        %1051 = vmatprep.subr.mxu0 0.0
        %1052 = vmatpush1.msra.mxu0 0.0
        %1053 = vmatprep.subr.mxu0 0.0
        %1054 = vmatpush1.msra.mxu0 0.0
        %1055 = vmatprep.subr.mxu0 0.0
        %1056 = vmatpush1.msra.mxu0 0.0
        %1057 = vmatprep.subr.mxu0 0.0
        %1058 = vmatpush1.msra.mxu0 0.0
        %1059 = vmatprep.subr.mxu0 0.0
        %1060 = vmatpush1.msra.mxu0 0.0
        %1061 = vmatprep.subr.mxu0 0.0
        %1062 = vmatpush1.msra.mxu0 0.0
        %1063 = vmatprep.subr.mxu0 0.0
        %1064 = vmatpush1.msra.mxu0 0.0
        %1065 = vmatprep.subr.mxu0 0.0
        %1066 = vmatpush1.msra.mxu0 0.0
        %1067 = vmatprep.subr.mxu0 0.0
        %1068 = vmatpush1.msra.mxu0 0.0
        %1069 = vmatprep.subr.mxu0 0.0
        %1070 = vmatpush1.msra.mxu0 0.0
        %1071 = vmatprep.subr.mxu0 0.0
        %1072 = vmatpush1.msra.mxu0 0.0
        %1073 = vmatprep.subr.mxu0 0.0
        %1074 = vmatpush1.msra.mxu0 0.0
        %1075 = vmatprep.subr.mxu0 0.0
        %1076 = vmatpush1.msra.mxu0 0.0
        %1077 = vmatprep.subr.mxu0 0.0
        %1078 = vmatpush1.msra.mxu0 0.0
        %1079 = vmatprep.subr.mxu0 0.0
        %1080 = vmatpush1.msra.mxu0 0.0
        %1081 = vmatprep.subr.mxu0 0.0
        %1082 = vmatpush1.msra.mxu0 0.0
        %1083 = vmatprep.subr.mxu0 0.0
        %1084 = vmatpush1.msra.mxu0 0.0
        %1085 = vmatprep.subr.mxu0 0.0
        %1086 = vmatpush1.msra.mxu0 0.0
        %1087 = vmatprep.subr.mxu0 0.0
        %1088 = vmatpush1.msra.mxu0 0.0
        %1089 = vmatprep.subr.mxu0 0.0
        %1090 = vmatpush1.msra.mxu0 0.0
        %1091 = vmatprep.subr.mxu0 0.0
        %1092 = vmatpush1.msra.mxu0 0.0
        %1093 = vmatprep.subr.mxu0 0.0
        %1094 = vmatpush1.msra.mxu0 0.0
        %1095 = vmatprep.mubr.f32.mxu0 0.0
        %1096 = vmatmul.mubr.f32.gmra.mrb[0].mxu0 %v1029
        %v1097 = vpop.f32.mrb[0].mxu0
        %v1098 = vadd.f32 %v1026, %v1097
        %v1099 = vpop.f32.mrb[0].mxu0
        %1100 = vdwg.mxu0
        %1101 = vst.msk [vmem:[%s241] sm:$0xff] %vm254, %v1098
        %s1102 = sand.u32 %s119, 1
        %s1103 = scalar_lea.sflag [#allocation4], %s1102
        %s1104 = sand.u32 %s119, 1
        %s1105 = smul.addr %s1104, 8
        %s1106 = scalar_lea.vmem [#allocation8], %s1105
        // Predicated region
        $region49: #{tpu_custom_call.1} parent=35 // pred_check
          %p1107 = pneg %p129
        $region50: #{tpu_custom_call.1} parent=35 // pred_check_branch
          %1109 = sbr.rel (%p1107) target = $region52
        $region51: #{tpu_custom_call.1} parent=35 // pred_region
          %s1111 = ssub.s32 128, 128
          %1112 = vsyncadd %s1103, %s1111
          %s1113 = smul.addr %s22, 128
          %s1114 = scalar_lea.hbm %s4, %s1113
          %s1116 = sshll.u32 %s1106, 4
          %s1117 = int_to_ptr.vmem [resolvable:$true] %s1116
          %1119 = dma.vmem_to_hbm [thread:$0]  %s1117, 128, %s1114, %s1103
        $region52: #{tpu_custom_call.1} parent=35 // pred_fallthru
          _
      $region36: #{tpu_custom_call.1} parent=5 // pred_fallthru
        _
      %p1120 = scmp.le.s32.totalorder 2, %s17
      // Predicated region
      $region53: #{tpu_custom_call.1} parent=5 // pred_check
        %p1121 = pneg %p1120
      $region54: #{tpu_custom_call.1} parent=5 // pred_check_branch
        %1123 = sbr.rel (%p1121) target = $region56
      $region55: #{tpu_custom_call.1} parent=5 // pred_region
        %s1124 = ssub.s32 %s17, 2
        // Predicated region
        $region57: #{tpu_custom_call.1} parent=55 // pred_check
          %p1125 = pneg %p135
        $region58: #{tpu_custom_call.1} parent=55 // pred_check_branch
          %1127 = sbr.rel (%p1125) target = $region60
        $region59: #{tpu_custom_call.1} parent=55 // pred_region
          %s1128 = sand.u32 %s120, 1
          %s1129 = scalar_lea.sflag [#allocation4], %s1128
          %s1130 = sand.u32 %s120, 1
          %s1131 = smul.addr %s1130, 8
          %s1132 = scalar_lea.vmem [#allocation8], %s1131
          %1133 = dma.done %s1129, 128
        $region60: #{tpu_custom_call.1} parent=55 // pred_fallthru
          _
      $region56: #{tpu_custom_call.1} parent=5 // pred_fallthru
        _
    $region6: #{tpu_custom_call.1} parent=1 // loop_footer
      %s21 = sadd.s32 1, %s17
    $region7: #{tpu_custom_call.1} parent=1 // loop_footer_branch
      %16 = sbr.rel target = $region3
    $region8: #{tpu_custom_call.1} parent=1 // loop_exit
      _
    %1134 = vsyncpa [#allocation3], 1
    %s1135 = scalar_lea.sflag [#allocation3], 1
    %1136 = vsyncpa %s1135, 1
    %1137 = vsyncpa [#allocation6], 1
    %1138 = vsyncpa [#allocation4], 1
    %s1139 = scalar_lea.sflag [#allocation4], 1
    %1140 = vsyncpa %s1139, 1

</llo_original>
